<compile_context>
chip_gen: v7x
topology: tpu7x:2x2x1
jax: 0.10.0
libtpu: 0.0.40
codegen_flags: <defaults>
</compile_context>

<pallas_src>
import functools

import jax
import jax.numpy as jnp
from jax.experimental import pallas as pl
from jax.experimental.pallas import tpu as pltpu


def _sem_head_kernel(x_ref, w1_ref, b1_ref, w2_ref, b2_ref,
                     score_ref, latent_ref, *, inv_hw, inv_T):
    # AdaptiveAvgPool2d(1): mean over the spatial (lane) axis.  The upcast is
    # fused into the reduction so a bf16 X tile never materialises in f32.
    pooled = jnp.sum(x_ref[...], axis=-1, dtype=jnp.float32) * inv_hw  # (tn, C)

    # classifier layer 1: Linear(C, hidden) + ReLU -> latent_variables
    latent = jnp.dot(pooled, w1_ref[...], preferred_element_type=jnp.float32)
    latent = jnp.maximum(latent + b1_ref[...], 0.0)                    # (tn, Hp)
    latent_ref[...] = latent.astype(latent_ref.dtype)

    # classifier layer 2: Linear(hidden, num_cluster), then divide by T.
    score = jnp.dot(latent, w2_ref[...], preferred_element_type=jnp.float32)
    score_ref[...] = ((score + b2_ref[...]) * inv_T).astype(score_ref.dtype)


def _round_up(v, m):
    return ((v + m - 1) // m) * m


def _sublane_tile(dtype):
    return {1: 32, 2: 16, 4: 8}.get(jnp.dtype(dtype).itemsize, 8)


def sem_head_forward(fea_nchw, w1, b1, w2, b2, *, T=1.0, tile_n=None):
    """fea_nchw: (N, C, H, W).  Returns (cls_score (N, K), latent (N, hidden))."""
    N, C, H, W = fea_nchw.shape
    HW = H * W
    hidden = w1.shape[1]
    K = w2.shape[1]
    x_dtype = fea_nchw.dtype            # stream X in its HBM dtype (no cast copy)
    x_itemsize = jnp.dtype(x_dtype).itemsize

    # Lane-dense padded widths (zero padding -> numerically identical results).
    hidden_p = _round_up(hidden, 128)
    K_p = _round_up(K, 128)

    # ---- VMEM accounting on PADDED footprints (not logical sizes) ----------
    x_row_bytes = (_round_up(C, _sublane_tile(x_dtype))
                   * _round_up(HW, 128) * x_itemsize)      # one batch row of X
    out_row_bytes = (hidden_p + K_p) * 4                    # f32 outputs
    per_row_bytes = 2 * x_row_bytes + 2 * out_row_bytes     # double-buffered
    weight_bytes = (_round_up(C, 8) * hidden_p + hidden_p
                    + hidden_p * K_p + K_p) * 4             # single-buffered

    try:
        phys_vmem = pltpu.get_tpu_info().vmem_capacity_bytes
    except Exception:                                        # unknown chip / interpret
        phys_vmem = 64 * 1024 * 1024
    budget = int(phys_vmem * 0.75)                           # headroom for Mosaic

    if tile_n is None:
        fit = (budget - weight_bytes) // max(per_row_bytes, 1)
        cap = (16 * 1024 * 1024) // max(x_row_bytes, 1)      # >=16 MiB X tile is
        tile_n = max(8, min(fit, cap) // 8 * 8)              # past diminishing returns

    # ---- batch tiling without a full-array pad copy of X -------------------
    if N <= tile_n:
        tile_n = N                      # single block == full dims; no padding
        n_rows = N
    else:
        t = (min(tile_n, N) // 8) * 8   # prefer a tile that divides N exactly
        while t >= 8 and N % t != 0:
            t -= 8
        if t >= 8:
            tile_n, n_rows = t, N
        else:
            tile_n = max(8, (tile_n // 8) * 8)
            n_rows = _round_up(N, tile_n)

    # NCHW -> (N, C, H*W) is a free contiguous view; no transpose pass over HBM.
    x = fea_nchw.reshape(N, C, HW)
    if n_rows != N:
        # TODO(synk): rare fallback (N not a multiple of 8); copies X in HBM.
        x = jnp.pad(x, ((0, n_rows - N), (0, 0), (0, 0)))

    # Zero-padded, lane-dense f32 parameters (constant-folds / hoists under jit;
    # precompute once outside the hot path if calling repeatedly).
    f32 = jnp.float32
    w1_p = jnp.zeros((C, hidden_p), f32).at[:, :hidden].set(w1.astype(f32))
    b1_p = jnp.zeros((1, hidden_p), f32).at[:, :hidden].set(b1.astype(f32))
    w2_p = jnp.zeros((hidden_p, K_p), f32).at[:hidden, :K].set(w2.astype(f32))
    b2_p = jnp.zeros((1, K_p), f32).at[:, :K].set(b2.astype(f32))

    kernel = functools.partial(_sem_head_kernel,
                               inv_hw=float(1.0 / HW), inv_T=float(1.0 / T))

    grid = (n_rows // tile_n,)
    vmem_limit = int(min(phys_vmem,
                         max(weight_bytes + per_row_bytes * tile_n + (4 << 20),
                             32 << 20)))
    resident = dict(pipeline_mode=pl.Buffered(1))   # params are never re-fetched

    score_p, latent_p = pl.pallas_call(
        kernel,
        out_shape=(
            jax.ShapeDtypeStruct((n_rows, K_p), f32),
            jax.ShapeDtypeStruct((n_rows, hidden_p), f32),
        ),
        grid_spec=pltpu.PrefetchScalarGridSpec(
            num_scalar_prefetch=0,
            grid=grid,
            in_specs=[
                pl.BlockSpec((tile_n, C, HW), lambda i: (i, 0, 0)),            # X tile
                pl.BlockSpec((C, hidden_p), lambda i: (0, 0), **resident),     # W1
                pl.BlockSpec((1, hidden_p), lambda i: (0, 0), **resident),     # b1
                pl.BlockSpec((hidden_p, K_p), lambda i: (0, 0), **resident),   # W2
                pl.BlockSpec((1, K_p), lambda i: (0, 0), **resident),          # b2
            ],
            out_specs=[
                pl.BlockSpec((tile_n, K_p), lambda i: (i, 0)),                 # cls_score
                pl.BlockSpec((tile_n, hidden_p), lambda i: (i, 0)),            # latent
            ],
        ),
        compiler_params=pltpu.CompilerParams(
            # TODO(synk): on v7x, consider pltpu.CORE_PARALLEL here if plain
            # "parallel" does not shard the batch grid across both TensorCores.
            dimension_semantics=("parallel",),
            vmem_limit_bytes=vmem_limit),
        cost_estimate=pl.CostEstimate(
            flops=2 * n_rows * (C * hidden_p + hidden_p * K_p) + n_rows * C * HW,
            transcendentals=0,
            bytes_accessed=(n_rows * C * HW * x_itemsize
                            + n_rows * (hidden_p + K_p) * 4
                            + weight_bytes)),
    )(x, w1_p, b1_p, w2_p, b2_p)

    # Slice away batch / lane padding.
    return score_p[:N, :K], latent_p[:N, :hidden]


def _reference_forward(fea_nchw, w1, b1, w2, b2, *, T=1.0):
    pooled = jnp.mean(fea_nchw, axis=(2, 3))        # AdaptiveAvgPool2d(1)+flatten
    latent = jnp.maximum(pooled @ w1 + b1, 0.0)
    score = (latent @ w2 + b2) / T
    return score, latent


if __name__ == "__main__":
    # Small shapes consistent with the module: batch=2, channels=4, spatial=16x16.
    N, C, H, W = 2, 4, 16, 16
    hidden, num_cluster = 32, 10
    T = 1.0  # default temperature (static per compilation)

    key = jax.random.PRNGKey(0)
    k_fea, k_w1, k_b1, k_w2, k_b2 = jax.random.split(key, 5)

    fea = jax.random.normal(k_fea, (N, C, H, W), dtype=jnp.float32)
    # Synthetic classifier parameters: Linear(C, hidden), Linear(hidden, K).
    w1 = jax.random.normal(k_w1, (C, hidden), dtype=jnp.float32) * 0.1
    b1 = jax.random.normal(k_b1, (hidden,), dtype=jnp.float32) * 0.1
    w2 = jax.random.normal(k_w2, (hidden, num_cluster), dtype=jnp.float32) * 0.1
    b2 = jax.random.normal(k_b2, (num_cluster,), dtype=jnp.float32) * 0.1

    # TODO(synk): feature_conv branch not instantiated (module default is None);
    # sample-selection / loss helpers are host-side training utilities, not forward.

    score, latent = sem_head_forward(fea, w1, b1, w2, b2, T=T)
    jax.block_until_ready((score, latent))

    ref_score, ref_latent = _reference_forward(fea, w1, b1, w2, b2, T=T)
    assert score.shape == (N, num_cluster) and latent.shape == (N, hidden)
    assert jnp.allclose(score, ref_score, atol=1e-4, rtol=1e-4)
    assert jnp.allclose(latent, ref_latent, atol=1e-4, rtol=1e-4)

    print("KERNEL_OK")
</pallas_src>

<mosaic_0001>
module attributes {stable_mosaic.version = 11 : i64} {
  func.func @_sem_head_kernel(%arg0: i32, %arg1: memref<2x4x256xf32, #tpu.memory_space<vmem>>, %arg2: memref<4x128xf32, #tpu.memory_space<vmem>>, %arg3: memref<1x128xf32, #tpu.memory_space<vmem>>, %arg4: memref<128x128xf32, #tpu.memory_space<vmem>>, %arg5: memref<1x128xf32, #tpu.memory_space<vmem>>, %arg6: memref<2x128xf32, #tpu.memory_space<vmem>>, %arg7: memref<2x128xf32, #tpu.memory_space<vmem>>) attributes {dimension_semantics = [#tpu.dimension_semantics<parallel>], iteration_bounds = array<i64: 1>, scalar_prefetch = 0 : i64, scratch_operands = 0 : i64, tpu.core_type = #tpu.core_type<tc>, window_params = [{transform_indices = @transform_0, window_bounds = array<i64: 2, 4, 256>}, {pipeline_mode = #tpu.pipeline_mode<synchronous>, transform_indices = @transform_1, window_bounds = array<i64: 4, 128>}, {pipeline_mode = #tpu.pipeline_mode<synchronous>, transform_indices = @transform_2, window_bounds = array<i64: 1, 128>}, {pipeline_mode = #tpu.pipeline_mode<synchronous>, transform_indices = @transform_3, window_bounds = array<i64: 128, 128>}, {pipeline_mode = #tpu.pipeline_mode<synchronous>, transform_indices = @transform_4, window_bounds = array<i64: 1, 128>}, {transform_indices = @transform_5, window_bounds = array<i64: 2, 128>}, {transform_indices = @transform_6, window_bounds = array<i64: 2, 128>}]} {
    %c0 = arith.constant 0 : index
    %c0_0 = arith.constant 0 : index
    %c0_1 = arith.constant 0 : index
    %0 = vector.load %arg1[%c0, %c0_0, %c0_1] : memref<2x4x256xf32, #tpu.memory_space<vmem>>, vector<2x4x256xf32>
    %cst = arith.constant dense<0.000000e+00> : vector<2x4xf32>
    %1 = vector.multi_reduction <add>, %0, %cst [2] : vector<2x4x256xf32> to vector<2x4xf32>
    %cst_2 = arith.constant 3.906250e-03 : f32
    %2 = vector.broadcast %cst_2 : f32 to vector<2x4xf32>
    %3 = arith.mulf %1, %2 : vector<2x4xf32>
    %c0_3 = arith.constant 0 : index
    %c0_4 = arith.constant 0 : index
    %4 = vector.load %arg2[%c0_3, %c0_4] : memref<4x128xf32, #tpu.memory_space<vmem>>, vector<4x128xf32>
    %cst_5 = arith.constant dense<0.000000e+00> : vector<2x128xf32>
    %5 = tpu.matmul %3, %4, %cst_5 {dimension_numbers = #tpu.dot_dimension_numbers<[1], [0], [0], [1], [0, 0, 1, 1], [], []>} : vector<2x4xf32>, vector<4x128xf32>, vector<2x128xf32> -> vector<2x128xf32>
    %c0_6 = arith.constant 0 : index
    %c0_7 = arith.constant 0 : index
    %6 = vector.load %arg3[%c0_6, %c0_7] : memref<1x128xf32, #tpu.memory_space<vmem>>, vector<1x128xf32>
    %7 = vector.broadcast %6 : vector<1x128xf32> to vector<2x128xf32>
    %8 = arith.addf %5, %7 : vector<2x128xf32>
    %cst_8 = arith.constant 0.000000e+00 : f32
    %9 = vector.broadcast %cst_8 : f32 to vector<2x128xf32>
    %10 = arith.maximumf %8, %9 : vector<2x128xf32>
    %c0_9 = arith.constant 0 : index
    %c0_10 = arith.constant 0 : index
    %11 = vector.load %arg7[%c0_9, %c0_10] : memref<2x128xf32, #tpu.memory_space<vmem>>, vector<2x128xf32>
    tpu.vector_store %arg7[%c0_9, %c0_10], %10 {strides = array<i32>} : memref<2x128xf32, #tpu.memory_space<vmem>>, vector<2x128xf32>,
    %c0_11 = arith.constant 0 : index
    %c0_12 = arith.constant 0 : index
    %12 = vector.load %arg4[%c0_11, %c0_12] : memref<128x128xf32, #tpu.memory_space<vmem>>, vector<128x128xf32>
    %cst_13 = arith.constant dense<0.000000e+00> : vector<2x128xf32>
    %13 = tpu.matmul %10, %12, %cst_13 {dimension_numbers = #tpu.dot_dimension_numbers<[1], [0], [0], [1], [0, 0, 1, 1], [], []>} : vector<2x128xf32>, vector<128x128xf32>, vector<2x128xf32> -> vector<2x128xf32>
    %c0_14 = arith.constant 0 : index
    %c0_15 = arith.constant 0 : index
    %14 = vector.load %arg5[%c0_14, %c0_15] : memref<1x128xf32, #tpu.memory_space<vmem>>, vector<1x128xf32>
    %15 = vector.broadcast %14 : vector<1x128xf32> to vector<2x128xf32>
    %16 = arith.addf %13, %15 : vector<2x128xf32>
    %cst_16 = arith.constant 1.000000e+00 : f32
    %17 = vector.broadcast %cst_16 : f32 to vector<2x128xf32>
    %18 = arith.mulf %16, %17 : vector<2x128xf32>
    %c0_17 = arith.constant 0 : index
    %c0_18 = arith.constant 0 : index
    %19 = vector.load %arg6[%c0_17, %c0_18] : memref<2x128xf32, #tpu.memory_space<vmem>>, vector<2x128xf32>
    tpu.vector_store %arg6[%c0_17, %c0_18], %18 {strides = array<i32>} : memref<2x128xf32, #tpu.memory_space<vmem>>, vector<2x128xf32>,
    return
  }
  func.func @transform_0(%arg0: i32) -> (i32, i32, i32) {
    %c0_i32 = arith.constant 0 : i32
    %c0_i32_0 = arith.constant 0 : i32
    %c0_i32_1 = arith.constant 0 : i32
    return %arg0, %c0_i32, %c0_i32_0 : i32, i32, i32
  }
  func.func @transform_1(%arg0: i32) -> (i32, i32) {
    %c0_i32 = arith.constant 0 : i32
    %c0_i32_0 = arith.constant 0 : i32
    %c0_i32_1 = arith.constant 0 : i32
    return %c0_i32, %c0_i32_0 : i32, i32
  }
  func.func @transform_2(%arg0: i32) -> (i32, i32) {
    %c0_i32 = arith.constant 0 : i32
    %c0_i32_0 = arith.constant 0 : i32
    %c0_i32_1 = arith.constant 0 : i32
    return %c0_i32, %c0_i32_0 : i32, i32
  }
  func.func @transform_3(%arg0: i32) -> (i32, i32) {
    %c0_i32 = arith.constant 0 : i32
    %c0_i32_0 = arith.constant 0 : i32
    %c0_i32_1 = arith.constant 0 : i32
    return %c0_i32, %c0_i32_0 : i32, i32
  }
  func.func @transform_4(%arg0: i32) -> (i32, i32) {
    %c0_i32 = arith.constant 0 : i32
    %c0_i32_0 = arith.constant 0 : i32
    %c0_i32_1 = arith.constant 0 : i32
    return %c0_i32, %c0_i32_0 : i32, i32
  }
  func.func @transform_5(%arg0: i32) -> (i32, i32) {
    %c0_i32 = arith.constant 0 : i32
    %c0_i32_0 = arith.constant 0 : i32
    return %arg0, %c0_i32 : i32, i32
  }
  func.func @transform_6(%arg0: i32) -> (i32, i32) {
    %c0_i32 = arith.constant 0 : i32
    %c0_i32_0 = arith.constant 0 : i32
    return %arg0, %c0_i32 : i32, i32
  }
}

</mosaic_0001>

<llo_original>
// kernel: tpu_custom_call.1
$region0: #{tpu_custom_call.1}
  #allocation0 [shape = 'u32[]', space=smem, size = 0x4, offset = 0x4, fixed_abs, tag = 'smem constant byte address 0x4 - core index']
  #allocation1 [shape = 'u32[144,128]{1,0:T(1,128)}', space=vmem, size = 0x12000, scoped, tag = 'internal scratch']
  %s0 = inlined_call_operand.hbm [shape: f32[2,4,256], index: 0, kind: input, shape index: {}]
  %s1 = inlined_call_operand.hbm [shape: f32[4,128], index: 1, kind: input, shape index: {}]
  %s2 = inlined_call_operand.vmem [shape: f32[1,128], index: 2, kind: input, shape index: {}]
  %s3 = inlined_call_operand.hbm [shape: f32[128,128], index: 3, kind: input, shape index: {}]
  %s4 = inlined_call_operand.vmem [shape: f32[1,128], index: 4, kind: input, shape index: {}]
  %s5 = inlined_call_operand.hbm [shape: f32[2,128], index: 5, kind: output, shape index: {0}]
  %s6 = inlined_call_operand.hbm [shape: f32[2,128], index: 6, kind: output, shape index: {1}]
  %7 = xla_tuple %s5, %s6
  %s8 = sld [smem:[#allocation0]]
  $region50: #{tpu_custom_call.1} parent=0
    _
  %s10 = ssub.s32 1, %s8
  %s11 = scalar_select 0, %s10, %s8
  $region1: #{tpu_custom_call.1} parent=0
    #allocation2 [shape = 'u8[8192]{0}', space=vmem, size = 0x2000, scoped, tag = 'input window, operand 0, single buffered']
    #allocation3 [shape = 's32[1]{0}', space=sflag, size = 0x4, scoped, tag = 'scoped memory for tpu_custom_call.1']
    #allocation4 [shape = 's32[1]{0}', space=sflag, size = 0x4, scoped, tag = 'scoped memory for tpu_custom_call.1']
    #allocation5 [shape = 'u8[2048]{0}', space=vmem, size = 0x800, scoped, tag = 'input window, operand 1, single buffered']
    #allocation6 [shape = 's32[1]{0}', space=sflag, size = 0x4, scoped, tag = 'scoped memory for tpu_custom_call.1']
    #allocation7 [shape = 'u8[65536]{0}', space=vmem, size = 0x10000, scoped, tag = 'input window, operand 3, single buffered']
    #allocation8 [shape = 'u8[1024]{0}', space=vmem, size = 0x400, scoped, tag = 'output window, operand 0, single buffered']
    #allocation9 [shape = 'u8[1024]{0}', space=vmem, size = 0x400, scoped, tag = 'output window, operand 1, single buffered']
    #allocation10 [shape = 's32[1]{0}', space=sflag, size = 0x4, scoped, tag = 'scoped memory for tpu_custom_call.1']
    %12 = vsyncpa [#allocation3], 0
    %13 = vsyncpa [#allocation6], 0
    %14 = vsyncpa [#allocation4], 0
    %15 = vsyncpa [#allocation10], 0
    // Predicated region
    $region2: #{tpu_custom_call.1} parent=1 // pred_check
      _
    $region3: #{tpu_custom_call.1} parent=1 // pred_check_branch
      %17 = sbr.rel (0) target = $region5
    $region4: #{tpu_custom_call.1} parent=1 // pred_region
      %s19 = ssub.s32 256, 256
      %20 = vsyncadd [#allocation3], %s19
      %s21 = sshll.u32 [#allocation2], 4
      %s22 = int_to_ptr.vmem [resolvable:$true] %s21
      %27 = dma.hbm_to_vmem [thread:$0]  %s0, 256, %s22, [#allocation3], 128, 128, 8
    $region5: #{tpu_custom_call.1} parent=1 // pred_fallthru
      _
    // Predicated region
    $region6: #{tpu_custom_call.1} parent=1 // pred_check
      _
    $region7: #{tpu_custom_call.1} parent=1 // pred_check_branch
      %29 = sbr.rel (0) target = $region9
    $region8: #{tpu_custom_call.1} parent=1 // pred_region
      %s31 = ssub.s32 64, 64
      %32 = vsyncadd [#allocation6], %s31
      %s34 = sshll.u32 [#allocation5], 4
      %s35 = int_to_ptr.vmem [resolvable:$true] %s34
      %37 = dma.hbm_to_vmem [thread:$0]  %s1, 64, %s35, [#allocation6]
    $region9: #{tpu_custom_call.1} parent=1 // pred_fallthru
      _
    // Predicated region
    $region10: #{tpu_custom_call.1} parent=1 // pred_check
      _
    $region11: #{tpu_custom_call.1} parent=1 // pred_check_branch
      %39 = sbr.rel (0) target = $region13
    $region12: #{tpu_custom_call.1} parent=1 // pred_region
      _
    $region13: #{tpu_custom_call.1} parent=1 // pred_fallthru
      _
    // Predicated region
    $region14: #{tpu_custom_call.1} parent=1 // pred_check
      _
    $region15: #{tpu_custom_call.1} parent=1 // pred_check_branch
      %41 = sbr.rel (0) target = $region17
    $region16: #{tpu_custom_call.1} parent=1 // pred_region
      %s43 = ssub.s32 2048, 2048
      %44 = vsyncadd [#allocation6], %s43
      %s45 = sshll.u32 [#allocation7], 4
      %s46 = int_to_ptr.vmem [resolvable:$true] %s45
      %51 = dma.hbm_to_vmem [thread:$0]  %s3, 2048, %s46, [#allocation6], 128, 128, 8
    $region17: #{tpu_custom_call.1} parent=1 // pred_fallthru
      _
    // Predicated region
    $region18: #{tpu_custom_call.1} parent=1 // pred_check
      _
    $region19: #{tpu_custom_call.1} parent=1 // pred_check_branch
      %53 = sbr.rel (0) target = $region21
    $region20: #{tpu_custom_call.1} parent=1 // pred_region
      _
    $region21: #{tpu_custom_call.1} parent=1 // pred_fallthru
      _
    // Predicated region
    $region22: #{tpu_custom_call.1} parent=1 // pred_check
      _
    $region23: #{tpu_custom_call.1} parent=1 // pred_check_branch
      %55 = sbr.rel (0) target = $region25
    $region24: #{tpu_custom_call.1} parent=1 // pred_region
      %56 = dma.done [#allocation3], 256
    $region25: #{tpu_custom_call.1} parent=1 // pred_fallthru
      _
    // Predicated region
    $region26: #{tpu_custom_call.1} parent=1 // pred_check
      _
    $region27: #{tpu_custom_call.1} parent=1 // pred_check_branch
      %58 = sbr.rel (0) target = $region29
    $region28: #{tpu_custom_call.1} parent=1 // pred_region
      %59 = dma.done [#allocation6], 64
    $region29: #{tpu_custom_call.1} parent=1 // pred_fallthru
      _
    // Predicated region
    $region30: #{tpu_custom_call.1} parent=1 // pred_check
      _
    $region31: #{tpu_custom_call.1} parent=1 // pred_check_branch
      %61 = sbr.rel (0) target = $region33
    $region32: #{tpu_custom_call.1} parent=1 // pred_region
      %62 = dma.done [#allocation6], 2048
    $region33: #{tpu_custom_call.1} parent=1 // pred_fallthru
      _
    %v63 = vld [vmem:[#allocation2] sm:$0xff]
    %v64 = vld [vmem:[#allocation2 + $0x8] sm:$0xff]
    %v67 = vcombine.high %v63, %v63
    %v68 = vcombine.high %v64, %v64
    %vm71 = vcmask 1043456
    %v72 = vsel %vm71, %v63, 0.0
    %v73 = vsel %vm71, %v67, 0.0
    %v74 = vadd.f32 %v72, %v73
    %75 = vadd.xlane.f32.xlu0 %v74
    %v76 = vpop.xlane.xlu0 %75
    %v77 = vsel %vm71, %v64, 0.0
    %v78 = vsel %vm71, %v68, 0.0
    %v79 = vadd.f32 %v77, %v78
    %80 = vadd.xlane.f32.xlu0 %v79
    %v81 = vpop.xlane.xlu0 %80
    %v82 = vmul.f32 %v76, 0.00390625
    %v83 = vmul.f32 %v81, 0.00390625
    %v84 = vld [vmem:[#allocation5] sm:$0xf]
    %v85 = vld [vmem:[%s2] sm:$0x1]
    %v87 = vlaneseq
    %v88 = vshrl.u32 %v87, 7
    %v89 = vsub.s32 0, %v88
    %v90 = vrot.slane %v85, %v89
    %v94 = vlaneseq
    %v95 = vand.u32 %v94, 127
    %v96 = vlaneseq
    %v97 = vshrl.u32 %v96, 7
    %v98 = vsub.s32 %v95, %v97
    %v99 = vrot.slane %v82, %v98
    %v100 = vlaneseq
    %v101 = vshrl.u32 %v100, 7
    %v102 = vsub.s32 %v95, %v101
    %v103 = vrot.slane %v83, %v102
    %vm104 = vcmask 1041409
    %v105 = vsel %vm104, %v103, %v99
    %vm106 = vcmask 31744
    %v107 = vsel %vm106, %v105, 0
    %v110 = vsel %vm71, %v84, 0
    %112 = vmatprep.subr.mxu0 0.0
    %113 = vmatpush1.msra.mxu0 %v110
    %114 = vmatprep.subr.mxu0 0.0
    %115 = vmatpush1.msra.mxu0 0.0
    %116 = vmatprep.subr.mxu0 0.0
    %117 = vmatpush1.msra.mxu0 0.0
    %118 = vmatprep.subr.mxu0 0.0
    %119 = vmatpush1.msra.mxu0 0.0
    %120 = vmatprep.subr.mxu0 0.0
    %121 = vmatpush1.msra.mxu0 0.0
    %122 = vmatprep.subr.mxu0 0.0
    %123 = vmatpush1.msra.mxu0 0.0
    %124 = vmatprep.subr.mxu0 0.0
    %125 = vmatpush1.msra.mxu0 0.0
    %126 = vmatprep.subr.mxu0 0.0
    %127 = vmatpush1.msra.mxu0 0.0
    %128 = vmatprep.subr.mxu0 0.0
    %129 = vmatpush1.msra.mxu0 0.0
    %130 = vmatprep.subr.mxu0 0.0
    %131 = vmatpush1.msra.mxu0 0.0
    %132 = vmatprep.subr.mxu0 0.0
    %133 = vmatpush1.msra.mxu0 0.0
    %134 = vmatprep.subr.mxu0 0.0
    %135 = vmatpush1.msra.mxu0 0.0
    %136 = vmatprep.subr.mxu0 0.0
    %137 = vmatpush1.msra.mxu0 0.0
    %138 = vmatprep.subr.mxu0 0.0
    %139 = vmatpush1.msra.mxu0 0.0
    %140 = vmatprep.subr.mxu0 0.0
    %141 = vmatpush1.msra.mxu0 0.0
    %142 = vmatprep.subr.mxu0 0.0
    %143 = vmatpush1.msra.mxu0 0.0
    %144 = vmatprep.subr.mxu0 0.0
    %145 = vmatpush1.msra.mxu0 0.0
    %146 = vmatprep.subr.mxu0 0.0
    %147 = vmatpush1.msra.mxu0 0.0
    %148 = vmatprep.subr.mxu0 0.0
    %149 = vmatpush1.msra.mxu0 0.0
    %150 = vmatprep.subr.mxu0 0.0
    %151 = vmatpush1.msra.mxu0 0.0
    %152 = vmatprep.subr.mxu0 0.0
    %153 = vmatpush1.msra.mxu0 0.0
    %154 = vmatprep.subr.mxu0 0.0
    %155 = vmatpush1.msra.mxu0 0.0
    %156 = vmatprep.subr.mxu0 0.0
    %157 = vmatpush1.msra.mxu0 0.0
    %158 = vmatprep.subr.mxu0 0.0
    %159 = vmatpush1.msra.mxu0 0.0
    %160 = vmatprep.subr.mxu0 0.0
    %161 = vmatpush1.msra.mxu0 0.0
    %162 = vmatprep.subr.mxu0 0.0
    %163 = vmatpush1.msra.mxu0 0.0
    %164 = vmatprep.subr.mxu0 0.0
    %165 = vmatpush1.msra.mxu0 0.0
    %166 = vmatprep.subr.mxu0 0.0
    %167 = vmatpush1.msra.mxu0 0.0
    %168 = vmatprep.subr.mxu0 0.0
    %169 = vmatpush1.msra.mxu0 0.0
    %170 = vmatprep.subr.mxu0 0.0
    %171 = vmatpush1.msra.mxu0 0.0
    %172 = vmatprep.subr.mxu0 0.0
    %173 = vmatpush1.msra.mxu0 0.0
    %174 = vmatprep.subr.mxu0 0.0
    %175 = vmatpush1.msra.mxu0 0.0
    %176 = vmatprep.mubr.f32.mxu0 0.0
    %177 = vmatmul.mubr.f32.gmra.mrb[0].mxu0 %v107
    %v178 = vpop.f32.mrb[0].mxu0
    %v179 = vadd.f32 %v90, %v178
    %v180 = vpop.f32.mrb[0].mxu0
    %181 = vdwg.mxu0
    %v182 = vmax.f32 %v179, 0.0
    %183 = vst [vmem:[#allocation9] sm:$0x3] %v182
    %v184 = vld [vmem:[#allocation7] sm:$0xff]
    %v185 = vld [vmem:[#allocation7 + $0x8] sm:$0xff]
    %v186 = vld [vmem:[#allocation7 + $0x10] sm:$0xff]
    %v187 = vld [vmem:[#allocation7 + $0x18] sm:$0xff]
    %v188 = vld [vmem:[#allocation7 + $0x20] sm:$0xff]
    %v189 = vld [vmem:[#allocation7 + $0x28] sm:$0xff]
    %v190 = vld [vmem:[#allocation7 + $0x30] sm:$0xff]
    %v191 = vld [vmem:[#allocation7 + $0x38] sm:$0xff]
    %v192 = vld [vmem:[#allocation7 + $0x40] sm:$0xff]
    %v193 = vld [vmem:[#allocation7 + $0x48] sm:$0xff]
    %v194 = vld [vmem:[#allocation7 + $0x50] sm:$0xff]
    %v195 = vld [vmem:[#allocation7 + $0x58] sm:$0xff]
    %v196 = vld [vmem:[#allocation7 + $0x60] sm:$0xff]
    %v197 = vld [vmem:[#allocation7 + $0x68] sm:$0xff]
    %v198 = vld [vmem:[#allocation7 + $0x70] sm:$0xff]
    %v199 = vld [vmem:[#allocation7 + $0x78] sm:$0xff]
    %v200 = vld [vmem:[%s4] sm:$0x1]
    %v202 = vlaneseq
    %v203 = vshrl.u32 %v202, 7
    %v204 = vsub.s32 0, %v203
    %v205 = vrot.slane %v200, %v204
    %207 = vmatprep.subr.mxu0 0.0
    %208 = vmatpush1.msra.mxu0 %v184
    %209 = vmatprep.subr.mxu0 0.0
    %210 = vmatpush1.msra.mxu0 %v185
    %211 = vmatprep.subr.mxu0 0.0
    %212 = vmatpush1.msra.mxu0 %v186
    %213 = vmatprep.subr.mxu0 0.0
    %214 = vmatpush1.msra.mxu0 %v187
    %215 = vmatprep.subr.mxu0 0.0
    %216 = vmatpush1.msra.mxu0 %v188
    %217 = vmatprep.subr.mxu0 0.0
    %218 = vmatpush1.msra.mxu0 %v189
    %219 = vmatprep.subr.mxu0 0.0
    %220 = vmatpush1.msra.mxu0 %v190
    %221 = vmatprep.subr.mxu0 0.0
    %222 = vmatpush1.msra.mxu0 %v191
    %223 = vmatprep.subr.mxu0 0.0
    %224 = vmatpush1.msra.mxu0 %v192
    %225 = vmatprep.subr.mxu0 0.0
    %226 = vmatpush1.msra.mxu0 %v193
    %227 = vmatprep.subr.mxu0 0.0
    %228 = vmatpush1.msra.mxu0 %v194
    %229 = vmatprep.subr.mxu0 0.0
    %230 = vmatpush1.msra.mxu0 %v195
    %231 = vmatprep.subr.mxu0 0.0
    %232 = vmatpush1.msra.mxu0 %v196
    %233 = vmatprep.subr.mxu0 0.0
    %234 = vmatpush1.msra.mxu0 %v197
    %235 = vmatprep.subr.mxu0 0.0
    %236 = vmatpush1.msra.mxu0 %v198
    %237 = vmatprep.subr.mxu0 0.0
    %238 = vmatpush1.msra.mxu0 %v199
    %239 = vmatprep.subr.mxu0 0.0
    %240 = vmatpush1.msra.mxu0 0.0
    %241 = vmatprep.subr.mxu0 0.0
    %242 = vmatpush1.msra.mxu0 0.0
    %243 = vmatprep.subr.mxu0 0.0
    %244 = vmatpush1.msra.mxu0 0.0
    %245 = vmatprep.subr.mxu0 0.0
    %246 = vmatpush1.msra.mxu0 0.0
    %247 = vmatprep.subr.mxu0 0.0
    %248 = vmatpush1.msra.mxu0 0.0
    %249 = vmatprep.subr.mxu0 0.0
    %250 = vmatpush1.msra.mxu0 0.0
    %251 = vmatprep.subr.mxu0 0.0
    %252 = vmatpush1.msra.mxu0 0.0
    %253 = vmatprep.subr.mxu0 0.0
    %254 = vmatpush1.msra.mxu0 0.0
    %255 = vmatprep.subr.mxu0 0.0
    %256 = vmatpush1.msra.mxu0 0.0
    %257 = vmatprep.subr.mxu0 0.0
    %258 = vmatpush1.msra.mxu0 0.0
    %259 = vmatprep.subr.mxu0 0.0
    %260 = vmatpush1.msra.mxu0 0.0
    %261 = vmatprep.subr.mxu0 0.0
    %262 = vmatpush1.msra.mxu0 0.0
    %263 = vmatprep.subr.mxu0 0.0
    %264 = vmatpush1.msra.mxu0 0.0
    %265 = vmatprep.subr.mxu0 0.0
    %266 = vmatpush1.msra.mxu0 0.0
    %267 = vmatprep.subr.mxu0 0.0
    %268 = vmatpush1.msra.mxu0 0.0
    %269 = vmatprep.subr.mxu0 0.0
    %270 = vmatpush1.msra.mxu0 0.0
    %271 = vmatprep.mubr.f32.mxu0 0.0
    %272 = vmatmul.mubr.f32.gmra.mrb[0].mxu0 %v182
    %v273 = vpop.f32.mrb[0].mxu0
    %v274 = vadd.f32 %v205, %v273
    %v275 = vpop.f32.mrb[0].mxu0
    %276 = vdwg.mxu0
    %277 = vst [vmem:[#allocation8] sm:$0x3] %v274
    // Predicated region
    $region34: #{tpu_custom_call.1} parent=1 // pred_check
      _
    $region35: #{tpu_custom_call.1} parent=1 // pred_check_branch
      %279 = sbr.rel (0) target = $region37
    $region36: #{tpu_custom_call.1} parent=1 // pred_region
      %s281 = ssub.s32 32, 32
      %282 = vsyncadd [#allocation4], %s281
      %s284 = sshll.u32 [#allocation8], 4
      %s285 = int_to_ptr.vmem [resolvable:$true] %s284
      %287 = dma.vmem_to_hbm [thread:$0]  %s285, 32, %s5, [#allocation4]
    $region37: #{tpu_custom_call.1} parent=1 // pred_fallthru
      _
    // Predicated region
    $region38: #{tpu_custom_call.1} parent=1 // pred_check
      _
    $region39: #{tpu_custom_call.1} parent=1 // pred_check_branch
      %289 = sbr.rel (0) target = $region41
    $region40: #{tpu_custom_call.1} parent=1 // pred_region
      %s291 = ssub.s32 32, 32
      %292 = vsyncadd [#allocation10], %s291
      %s294 = sshll.u32 [#allocation9], 4
      %s295 = int_to_ptr.vmem [resolvable:$true] %s294
      %297 = dma.vmem_to_hbm [thread:$0]  %s295, 32, %s6, [#allocation10]
    $region41: #{tpu_custom_call.1} parent=1 // pred_fallthru
      _
    // Predicated region
    $region42: #{tpu_custom_call.1} parent=1 // pred_check
      _
    $region43: #{tpu_custom_call.1} parent=1 // pred_check_branch
      %299 = sbr.rel (0) target = $region45
    $region44: #{tpu_custom_call.1} parent=1 // pred_region
      %300 = dma.done [#allocation4], 32
    $region45: #{tpu_custom_call.1} parent=1 // pred_fallthru
      _
    // Predicated region
    $region46: #{tpu_custom_call.1} parent=1 // pred_check
      _
    $region47: #{tpu_custom_call.1} parent=1 // pred_check_branch
      %302 = sbr.rel (0) target = $region49
    $region48: #{tpu_custom_call.1} parent=1 // pred_region
      %303 = dma.done [#allocation10], 32
    $region49: #{tpu_custom_call.1} parent=1 // pred_fallthru
      _
    %304 = vsyncpa [#allocation3], 1
    %305 = vsyncpa [#allocation6], 1
    %306 = vsyncpa [#allocation4], 1
    %307 = vsyncpa [#allocation10], 1

</llo_original>
